<compile_context>
chip_gen: v7x
topology: tpu7x:2x2x1
jax: 0.10.0
libtpu: 0.0.40
codegen_flags: <defaults>
</compile_context>

<pallas_src>
import jax
import jax.numpy as jnp
from jax.experimental import pallas as pl
from jax.experimental.pallas import tpu as pltpu


_LANE = 128          # lane width of a vreg; block last dim must be a multiple
_MAX_TILE_M = 1024   # 1024 x 128 x 4B = 512 KiB per buffer (fits all chips)


def _copy_kernel(x_ref, o_ref):
    # Pure pass-through: one large lane-dense VMEM load + unmasked VMEM store.
    o_ref[...] = x_ref[...]


def _sublane_multiple(dtype) -> int:
    """Minimum second-minor tile multiple for a given element width."""
    itemsize = jnp.dtype(dtype).itemsize
    if itemsize >= 4:
        return 8
    if itemsize == 2:
        return 16
    return 32


def physics_forward(F: jnp.ndarray) -> jnp.ndarray:
    """Compute corrected deformation gradient (identity) via a Pallas kernel.

    Args:
        F: deformation gradient tensor, shape (B, 3, 3).

    Returns:
        F_corrected: corrected deformation gradient tensor, shape (B, 3, 3).
    """
    orig_shape = F.shape
    n = 1
    for d in orig_shape:
        n *= d

    if n == 0:
        # Nothing to copy; identity on an empty tensor.
        return F

    flat = F.reshape(-1)

    # Rows of a lane-dense (M, 128) view, rounded up to the sublane multiple.
    sub = _sublane_multiple(F.dtype)
    rows = pl.cdiv(n, _LANE)
    rows = pl.cdiv(rows, sub) * sub

    # Tile rows: as large as possible up to _MAX_TILE_M, multiple of `sub`.
    tile_m = min(_MAX_TILE_M, rows)

    # Pad total rows so tile_m evenly divides them (at most one extra tile).
    rows_padded = pl.cdiv(rows, tile_m) * tile_m
    padded_len = rows_padded * _LANE
    needs_pad = padded_len != n
    if needs_pad:
        flat = jnp.pad(flat, (0, padded_len - n))

    x2d = flat.reshape(rows_padded, _LANE)
    num_tiles = rows_padded // tile_m

    out2d = pl.pallas_call(
        _copy_kernel,
        out_shape=jax.ShapeDtypeStruct((rows_padded, _LANE), F.dtype),
        grid=(num_tiles,),
        in_specs=[pl.BlockSpec((tile_m, _LANE), lambda i: (i, 0))],
        out_specs=pl.BlockSpec((tile_m, _LANE), lambda i: (i, 0)),
        compiler_params=pltpu.CompilerParams(
            dimension_semantics=("parallel",),
        ),
    )(x2d)

    # Strip padding (if any) and restore the original (B, 3, 3) layout.
    if needs_pad:
        return out2d.reshape(-1)[:n].reshape(orig_shape)
    return out2d.reshape(orig_shape)


if __name__ == "__main__":
    key = jax.random.PRNGKey(0)
    B = 8
    F = jax.random.normal(key, (B, 3, 3), dtype=jnp.float32)

    F_corrected = physics_forward(F)
    jax.block_until_ready(F_corrected)

    assert F_corrected.shape == (B, 3, 3)
    assert F_corrected.dtype == F.dtype
    assert jnp.allclose(F_corrected, F)

    print("KERNEL_OK")
</pallas_src>

<mosaic_0001>
module attributes {stable_mosaic.version = 11 : i64} {
  func.func @_copy_kernel(%arg0: i32, %arg1: memref<8x128xf32, #tpu.memory_space<vmem>>, %arg2: memref<8x128xf32, #tpu.memory_space<vmem>>) attributes {dimension_semantics = [#tpu.dimension_semantics<parallel>], iteration_bounds = array<i64: 1>, scalar_prefetch = 0 : i64, scratch_operands = 0 : i64, tpu.core_type = #tpu.core_type<tc>, window_params = [{transform_indices = @transform_0, window_bounds = array<i64: 8, 128>}, {transform_indices = @transform_1, window_bounds = array<i64: 8, 128>}]} {
    %c0 = arith.constant 0 : index
    %c0_0 = arith.constant 0 : index
    %0 = vector.load %arg1[%c0, %c0_0] : memref<8x128xf32, #tpu.memory_space<vmem>>, vector<8x128xf32>
    %c0_1 = arith.constant 0 : index
    %c0_2 = arith.constant 0 : index
    %1 = vector.load %arg2[%c0_1, %c0_2] : memref<8x128xf32, #tpu.memory_space<vmem>>, vector<8x128xf32>
    tpu.vector_store %arg2[%c0_1, %c0_2], %0 {strides = array<i32>} : memref<8x128xf32, #tpu.memory_space<vmem>>, vector<8x128xf32>,
    return
  }
  func.func @transform_0(%arg0: i32) -> (i32, i32) {
    %c0_i32 = arith.constant 0 : i32
    %c0_i32_0 = arith.constant 0 : i32
    return %arg0, %c0_i32 : i32, i32
  }
  func.func @transform_1(%arg0: i32) -> (i32, i32) {
    %c0_i32 = arith.constant 0 : i32
    %c0_i32_0 = arith.constant 0 : i32
    return %arg0, %c0_i32 : i32, i32
  }
}

</mosaic_0001>

<llo_original>
// kernel: tpu_custom_call.1
$region0: #{tpu_custom_call.1}
  #allocation0 [shape = 'u32[]', space=smem, size = 0x4, offset = 0x4, fixed_abs, tag = 'smem constant byte address 0x4 - core index']
  #allocation1 [shape = 'u32[144,128]{1,0:T(1,128)}', space=vmem, size = 0x12000, scoped, tag = 'internal scratch']
  %s0 = inlined_call_operand.hbm [shape: f32[8,128], index: 0, kind: input, shape index: {}]
  %s1 = inlined_call_operand.hbm [shape: f32[8,128], index: 1, kind: output, shape index: {}]
  %s2 = sld [smem:[#allocation0]]
  $region18: #{tpu_custom_call.1} parent=0
    _
  %s4 = ssub.s32 1, %s2
  %s5 = scalar_select 0, %s4, %s2
  $region1: #{tpu_custom_call.1} parent=0
    #allocation2 [shape = 'u8[4096]{0}', space=vmem, size = 0x1000, scoped, tag = 'input window, operand 0, single buffered']
    #allocation3 [shape = 's32[1]{0}', space=sflag, size = 0x4, scoped, tag = 'scoped memory for tpu_custom_call.1']
    #allocation4 [shape = 's32[1]{0}', space=sflag, size = 0x4, scoped, tag = 'scoped memory for tpu_custom_call.1']
    #allocation5 [shape = 'u8[4096]{0}', space=vmem, size = 0x1000, scoped, tag = 'output window, operand 0, single buffered']
    %6 = vsyncpa [#allocation3], 0
    %7 = vsyncpa [#allocation4], 0
    // Predicated region
    $region2: #{tpu_custom_call.1} parent=1 // pred_check
      _
    $region3: #{tpu_custom_call.1} parent=1 // pred_check_branch
      %9 = sbr.rel (0) target = $region5
    $region4: #{tpu_custom_call.1} parent=1 // pred_region
      %s11 = ssub.s32 128, 128
      %12 = vsyncadd [#allocation3], %s11
      %s14 = sshll.u32 [#allocation2], 4
      %s15 = int_to_ptr.vmem [resolvable:$true] %s14
      %17 = dma.hbm_to_vmem [thread:$0]  %s0, 128, %s15, [#allocation3]
    $region5: #{tpu_custom_call.1} parent=1 // pred_fallthru
      _
    // Predicated region
    $region6: #{tpu_custom_call.1} parent=1 // pred_check
      _
    $region7: #{tpu_custom_call.1} parent=1 // pred_check_branch
      %19 = sbr.rel (0) target = $region9
    $region8: #{tpu_custom_call.1} parent=1 // pred_region
      %20 = dma.done [#allocation3], 128
    $region9: #{tpu_custom_call.1} parent=1 // pred_fallthru
      _
    %v21 = vld [vmem:[#allocation2] sm:$0xff]
    %22 = vst [vmem:[#allocation5] sm:$0xff] %v21
    // Predicated region
    $region10: #{tpu_custom_call.1} parent=1 // pred_check
      _
    $region11: #{tpu_custom_call.1} parent=1 // pred_check_branch
      %24 = sbr.rel (0) target = $region13
    $region12: #{tpu_custom_call.1} parent=1 // pred_region
      %s26 = ssub.s32 128, 128
      %27 = vsyncadd [#allocation4], %s26
      %s29 = sshll.u32 [#allocation5], 4
      %s30 = int_to_ptr.vmem [resolvable:$true] %s29
      %32 = dma.vmem_to_hbm [thread:$0]  %s30, 128, %s1, [#allocation4]
    $region13: #{tpu_custom_call.1} parent=1 // pred_fallthru
      _
    // Predicated region
    $region14: #{tpu_custom_call.1} parent=1 // pred_check
      _
    $region15: #{tpu_custom_call.1} parent=1 // pred_check_branch
      %34 = sbr.rel (0) target = $region17
    $region16: #{tpu_custom_call.1} parent=1 // pred_region
      %35 = dma.done [#allocation4], 128
    $region17: #{tpu_custom_call.1} parent=1 // pred_fallthru
      _
    %36 = vsyncpa [#allocation3], 1
    %37 = vsyncpa [#allocation4], 1

</llo_original>
